<compile_context>
chip_gen: v7x
topology: tpu7x:2x2x1
jax: 0.10.0
libtpu: 0.0.40
codegen_flags: <defaults>
</compile_context>

<pallas_src>
import functools
import math

import jax
import jax.numpy as jnp
from jax.experimental import pallas as pl
from jax.experimental.pallas import tpu as pltpu


def _round_up(x: int, m: int) -> int:
    return ((x + m - 1) // m) * m


def _tpe_kernel(t_ref, div_ref, phase_ref, o_ref, *, use_dot: bool):
    # t_ref:     (TS, fold)        -- `fold` consecutive event times per row
    # div_ref:   (fold, fold*D)    -- block-diagonal selector (resident const)
    #            or (1, D) when fold == 1
    # phase_ref: (1, fold*D)       -- 0 on even cols of each D-block, pi/2 on odd
    # o_ref:     (TS, fold*D)      -- lane-dense output tile
    t = t_ref[...]
    phase = phase_ref[...]
    if use_dot:
        # Broadcast + interleave on the (otherwise idle) MXU so the single
        # jnp.sin below runs on full 128-lane vregs.
        r = jnp.dot(t, div_ref[...], preferred_element_type=jnp.float32)
    else:
        # fold == 1 (emb_dim is already a multiple of 128): plain broadcast.
        r = t * div_ref[...]
    # sin(x + pi/2) == cos(x): one transcendental per element, even/odd select
    # is folded into the precomputed phase vector.
    o_ref[...] = jnp.sin(r + phase).astype(o_ref.dtype)


def time_positional_encoding(event_times: jax.Array, div_term: jax.Array,
                             *, block_rows: int = 1024,
                             out_dtype=jnp.float32) -> jax.Array:
    """
    event_times: (seq_len, 1) float32
    div_term:    (embedding_dim,) float32
    returns:     (seq_len, embedding_dim) out_dtype (default float32)
    """
    seq_len = event_times.shape[0]
    emb_dim = div_term.shape[0]

    # Fold factor: pack `fold` consecutive sequence positions per output row so
    # the kernel output last dim is a multiple of 128 lanes (same row-major
    # memory, so the wrapper reshape is free).
    fold = 128 // math.gcd(emb_dim, 128)
    lane_w = fold * emb_dim

    # Sublane granularity for the output dtype (bf16 packs 16 rows per vreg).
    row_mult = 16 if out_dtype == jnp.bfloat16 else 8

    rows_needed = -(-seq_len // fold)
    rows_pad = _round_up(max(rows_needed, 1), row_mult)   # minimal padding only
    seq_pad = rows_pad * fold

    # Row tile: as large as useful, capped by a VMEM budget (double-buffered).
    max_tile_bytes = 4 * 1024 * 1024
    vmem_rows = max(row_mult,
                    (max_tile_bytes // (lane_w * 4)) // row_mult * row_mult)
    tile_rows = min(_round_up(block_rows, row_mult), rows_pad, vmem_rows)

    # v7x has 2 TensorCores: ensure >=2 (ideally >=4) grid steps so the
    # "parallel" axis can be sharded across both cores.
    if rows_pad >= 4 * row_mult:
        tile_rows = min(tile_rows, _round_up(pl.cdiv(rows_pad, 4), row_mult))
    elif rows_pad >= 2 * row_mult:
        tile_rows = min(tile_rows, _round_up(pl.cdiv(rows_pad, 2), row_mult))

    grid = (pl.cdiv(rows_pad, tile_rows),)   # edge block masked, not padded

    t = event_times.astype(jnp.float32).reshape(-1)
    if seq_pad != seq_len:
        t = jnp.pad(t, (0, seq_pad - seq_len))
    t_folded = t.reshape(rows_pad, fold)

    # Phase trick vector: 0 on even columns (sin), pi/2 on odd columns (cos),
    # tiled across the fold blocks.
    phase = jnp.where(jnp.arange(emb_dim) % 2 == 0,
                      0.0, jnp.pi / 2.0).astype(jnp.float32)
    phase_lane = jnp.tile(phase, fold).reshape(1, lane_w)

    use_dot = fold > 1
    if use_dot:
        # Block-diagonal selector: div_sel[j, j*D + k] = div_term[k].
        eye = jnp.eye(fold, dtype=jnp.float32)
        div_arg = (eye[:, :, None] *
                   div_term.astype(jnp.float32)[None, None, :]
                   ).reshape(fold, lane_w)
        div_block = (fold, lane_w)
    else:
        div_arg = div_term.astype(jnp.float32).reshape(1, emb_dim)
        div_block = (1, emb_dim)

    kernel = functools.partial(_tpe_kernel, use_dot=use_dot)
    out_folded = pl.pallas_call(
        kernel,
        out_shape=jax.ShapeDtypeStruct((rows_pad, lane_w), out_dtype),
        grid=grid,
        in_specs=[
            pl.BlockSpec((tile_rows, fold), lambda i: (i, 0)),
            pl.BlockSpec(div_block, lambda i: (0, 0)),      # resident constant
            pl.BlockSpec((1, lane_w), lambda i: (0, 0)),    # resident constant
        ],
        out_specs=pl.BlockSpec((tile_rows, lane_w), lambda i: (i, 0)),
        compiler_params=pltpu.CompilerParams(
            dimension_semantics=("parallel",)),
    )(t_folded, div_arg, phase_lane)

    # (rows_pad, fold*D) row-major is the same memory as (seq_pad, D).
    out = out_folded.reshape(seq_pad, emb_dim)
    if seq_pad != seq_len:
        # Pad is < row_mult*fold rows; this slice normally fuses downstream.
        out = out[:seq_len]
    return out


def time_positional_encoding_batched(event_times: jax.Array,
                                     div_term: jax.Array,
                                     **kwargs) -> jax.Array:
    """(batch, seq_len, 1) -> (batch, seq_len, D); folds batch*seq into the
    row axis of a single pallas_call to amortize launch/pipeline overhead."""
    b, s = event_times.shape[0], event_times.shape[1]
    flat = event_times.reshape(b * s, 1)
    out = time_positional_encoding(flat, div_term, **kwargs)
    return out.reshape(b, s, div_term.shape[0])


def make_div_term(embedding_dim: int) -> jax.Array:
    # Matches torch: exp(2 * (i // 2) * -(log(10000) / embedding_dim))
    i = jnp.arange(0, embedding_dim, 1)
    return jnp.exp(2.0 * (i // 2).astype(jnp.float32)
                   * -(math.log(10000.0) / embedding_dim))


def _reference(event_times: jax.Array, div_term: jax.Array) -> jax.Array:
    r = event_times.astype(jnp.float32) * div_term[None, :].astype(jnp.float32)
    r = r.at[:, 0::2].set(jnp.sin(r[:, 0::2]))
    r = r.at[:, 1::2].set(jnp.cos(r[:, 1::2]))
    return r


if __name__ == "__main__":
    key = jax.random.PRNGKey(0)
    k1, k2, k3, k4 = jax.random.split(key, 4)

    # Primary small example matching the module spec: (seq_len, 1) -> (seq_len, D).
    seq_len, emb_dim = 8, 32
    event_times = jax.random.uniform(k1, (seq_len, 1), jnp.float32, 0.0, 10.0)
    div_term = make_div_term(emb_dim)
    out = jax.block_until_ready(time_positional_encoding(event_times, div_term))
    assert out.shape == (seq_len, emb_dim)
    assert jnp.allclose(out, _reference(event_times, div_term), atol=1e-5), \
        "mismatch vs reference (D=32)"

    # Embedding dim that does not divide 128 (generalized fold rule path).
    t2 = jax.random.uniform(k2, (50, 1), jnp.float32, 0.0, 10.0)
    d2 = make_div_term(48)
    o2 = jax.block_until_ready(time_positional_encoding(t2, d2))
    assert o2.shape == (50, 48)
    assert jnp.allclose(o2, _reference(t2, d2), atol=1e-5), \
        "mismatch vs reference (D=48)"

    # Longer sequence: multi-step parallel grid with a masked partial edge block.
    t3 = jax.random.uniform(k3, (1030, 1), jnp.float32, 0.0, 10.0)
    o3 = jax.block_until_ready(time_positional_encoding(t3, div_term))
    assert o3.shape == (1030, emb_dim)
    assert jnp.allclose(o3, _reference(t3, div_term), atol=1e-5), \
        "mismatch vs reference (long seq)"

    # Batched entry point (batch folded into the row axis of one pallas_call).
    tb = jax.random.uniform(k4, (2, 16, 1), jnp.float32, 0.0, 10.0)
    ob = jax.block_until_ready(time_positional_encoding_batched(tb, div_term))
    assert ob.shape == (2, 16, emb_dim)
    assert jnp.allclose(ob.reshape(-1, emb_dim),
                        _reference(tb.reshape(-1, 1), div_term), atol=1e-5), \
        "mismatch vs reference (batched)"

    print("KERNEL_OK")
</pallas_src>

<mosaic_0001>
module attributes {stable_mosaic.version = 11 : i64} {
  func.func @_tpe_kernel(%arg0: i32, %arg1: memref<8x4xf32, #tpu.memory_space<vmem>>, %arg2: memref<4x128xf32, #tpu.memory_space<vmem>>, %arg3: memref<1x128xf32, #tpu.memory_space<vmem>>, %arg4: memref<8x128xf32, #tpu.memory_space<vmem>>) attributes {dimension_semantics = [#tpu.dimension_semantics<parallel>], iteration_bounds = array<i64: 1>, scalar_prefetch = 0 : i64, scratch_operands = 0 : i64, tpu.core_type = #tpu.core_type<tc>, window_params = [{transform_indices = @transform_0, window_bounds = array<i64: 8, 4>}, {pipeline_mode = #tpu.pipeline_mode<synchronous>, transform_indices = @transform_1, window_bounds = array<i64: 4, 128>}, {pipeline_mode = #tpu.pipeline_mode<synchronous>, transform_indices = @transform_2, window_bounds = array<i64: 1, 128>}, {transform_indices = @transform_3, window_bounds = array<i64: 8, 128>}]} {
    %c0 = arith.constant 0 : index
    %c0_0 = arith.constant 0 : index
    %0 = vector.load %arg1[%c0, %c0_0] : memref<8x4xf32, #tpu.memory_space<vmem>>, vector<8x4xf32>
    %c0_1 = arith.constant 0 : index
    %c0_2 = arith.constant 0 : index
    %1 = vector.load %arg3[%c0_1, %c0_2] : memref<1x128xf32, #tpu.memory_space<vmem>>, vector<1x128xf32>
    %c0_3 = arith.constant 0 : index
    %c0_4 = arith.constant 0 : index
    %2 = vector.load %arg2[%c0_3, %c0_4] : memref<4x128xf32, #tpu.memory_space<vmem>>, vector<4x128xf32>
    %cst = arith.constant dense<0.000000e+00> : vector<8x128xf32>
    %3 = tpu.matmul %0, %2, %cst {dimension_numbers = #tpu.dot_dimension_numbers<[1], [0], [0], [1], [0, 0, 1, 1], [], []>} : vector<8x4xf32>, vector<4x128xf32>, vector<8x128xf32> -> vector<8x128xf32>
    %4 = vector.broadcast %1 : vector<1x128xf32> to vector<8x128xf32>
    %5 = arith.addf %3, %4 : vector<8x128xf32>
    %6 = math.sin %5 : vector<8x128xf32>
    %c0_5 = arith.constant 0 : index
    %c0_6 = arith.constant 0 : index
    %7 = vector.load %arg4[%c0_5, %c0_6] : memref<8x128xf32, #tpu.memory_space<vmem>>, vector<8x128xf32>
    tpu.vector_store %arg4[%c0_5, %c0_6], %6 {strides = array<i32>} : memref<8x128xf32, #tpu.memory_space<vmem>>, vector<8x128xf32>,
    return
  }
  func.func @transform_0(%arg0: i32) -> (i32, i32) {
    %c0_i32 = arith.constant 0 : i32
    %c0_i32_0 = arith.constant 0 : i32
    return %arg0, %c0_i32 : i32, i32
  }
  func.func @transform_1(%arg0: i32) -> (i32, i32) {
    %c0_i32 = arith.constant 0 : i32
    %c0_i32_0 = arith.constant 0 : i32
    %c0_i32_1 = arith.constant 0 : i32
    return %c0_i32, %c0_i32_0 : i32, i32
  }
  func.func @transform_2(%arg0: i32) -> (i32, i32) {
    %c0_i32 = arith.constant 0 : i32
    %c0_i32_0 = arith.constant 0 : i32
    %c0_i32_1 = arith.constant 0 : i32
    return %c0_i32, %c0_i32_0 : i32, i32
  }
  func.func @transform_3(%arg0: i32) -> (i32, i32) {
    %c0_i32 = arith.constant 0 : i32
    %c0_i32_0 = arith.constant 0 : i32
    return %arg0, %c0_i32 : i32, i32
  }
}

</mosaic_0001>

<llo_original>
// kernel: tpu_custom_call.1
$region0: #{tpu_custom_call.1}
  #allocation0 [shape = 'u32[]', space=smem, size = 0x4, offset = 0x4, fixed_abs, tag = 'smem constant byte address 0x4 - core index']
  #allocation1 [shape = 'u32[144,128]{1,0:T(1,128)}', space=vmem, size = 0x12000, scoped, tag = 'internal scratch']
  %s0 = inlined_call_operand.vmem [shape: f32[8,4], index: 0, kind: input, shape index: {}]
  %s1 = inlined_call_operand.vmem [shape: f32[4,128], index: 1, kind: input, shape index: {}]
  %s2 = inlined_call_operand.vmem [shape: f32[1,128], index: 2, kind: input, shape index: {}]
  %s3 = inlined_call_operand.hbm [shape: f32[8,128], index: 3, kind: output, shape index: {}]
  %s4 = sld [smem:[#allocation0]]
  $region22: #{tpu_custom_call.1} parent=0
    _
  %s6 = ssub.s32 1, %s4
  %s7 = scalar_select 0, %s6, %s4
  $region1: #{tpu_custom_call.1} parent=0
    #allocation2 [shape = 'u8[4096]{0}', space=vmem, size = 0x1000, scoped, tag = 'output window, operand 0, single buffered']
    #allocation3 [shape = 's32[1]{0}', space=sflag, size = 0x4, scoped, tag = 'scoped memory for tpu_custom_call.1']
    %8 = vsyncpa [#allocation3], 0
    // Predicated region
    $region2: #{tpu_custom_call.1} parent=1 // pred_check
      _
    $region3: #{tpu_custom_call.1} parent=1 // pred_check_branch
      %10 = sbr.rel (0) target = $region5
    $region4: #{tpu_custom_call.1} parent=1 // pred_region
      _
    $region5: #{tpu_custom_call.1} parent=1 // pred_fallthru
      _
    // Predicated region
    $region6: #{tpu_custom_call.1} parent=1 // pred_check
      _
    $region7: #{tpu_custom_call.1} parent=1 // pred_check_branch
      %12 = sbr.rel (0) target = $region9
    $region8: #{tpu_custom_call.1} parent=1 // pred_region
      _
    $region9: #{tpu_custom_call.1} parent=1 // pred_fallthru
      _
    // Predicated region
    $region10: #{tpu_custom_call.1} parent=1 // pred_check
      _
    $region11: #{tpu_custom_call.1} parent=1 // pred_check_branch
      %14 = sbr.rel (0) target = $region13
    $region12: #{tpu_custom_call.1} parent=1 // pred_region
      _
    $region13: #{tpu_custom_call.1} parent=1 // pred_fallthru
      _
    %v15 = vld [vmem:[%s0] sm:$0xff]
    %v16 = vld [vmem:[%s2] sm:$0x1]
    %v17 = vld [vmem:[%s1] sm:$0xf]
    %v19 = vlaneseq
    %v20 = vshrl.u32 %v19, 7
    %v21 = vsub.s32 0, %v20
    %v22 = vrot.slane %v16, %v21
    %vm24 = vcmask 31744
    %v26 = vsel %vm24, %v15, 0
    %vm28 = vcmask 1043456
    %v30 = vsel %vm28, %v17, 0
    %32 = vmatprep.subr.mxu0 0.0
    %33 = vmatpush1.msra.mxu0 %v30
    %34 = vmatprep.subr.mxu0 0.0
    %35 = vmatpush1.msra.mxu0 0.0
    %36 = vmatprep.subr.mxu0 0.0
    %37 = vmatpush1.msra.mxu0 0.0
    %38 = vmatprep.subr.mxu0 0.0
    %39 = vmatpush1.msra.mxu0 0.0
    %40 = vmatprep.subr.mxu0 0.0
    %41 = vmatpush1.msra.mxu0 0.0
    %42 = vmatprep.subr.mxu0 0.0
    %43 = vmatpush1.msra.mxu0 0.0
    %44 = vmatprep.subr.mxu0 0.0
    %45 = vmatpush1.msra.mxu0 0.0
    %46 = vmatprep.subr.mxu0 0.0
    %47 = vmatpush1.msra.mxu0 0.0
    %48 = vmatprep.subr.mxu0 0.0
    %49 = vmatpush1.msra.mxu0 0.0
    %50 = vmatprep.subr.mxu0 0.0
    %51 = vmatpush1.msra.mxu0 0.0
    %52 = vmatprep.subr.mxu0 0.0
    %53 = vmatpush1.msra.mxu0 0.0
    %54 = vmatprep.subr.mxu0 0.0
    %55 = vmatpush1.msra.mxu0 0.0
    %56 = vmatprep.subr.mxu0 0.0
    %57 = vmatpush1.msra.mxu0 0.0
    %58 = vmatprep.subr.mxu0 0.0
    %59 = vmatpush1.msra.mxu0 0.0
    %60 = vmatprep.subr.mxu0 0.0
    %61 = vmatpush1.msra.mxu0 0.0
    %62 = vmatprep.subr.mxu0 0.0
    %63 = vmatpush1.msra.mxu0 0.0
    %64 = vmatprep.subr.mxu0 0.0
    %65 = vmatpush1.msra.mxu0 0.0
    %66 = vmatprep.subr.mxu0 0.0
    %67 = vmatpush1.msra.mxu0 0.0
    %68 = vmatprep.subr.mxu0 0.0
    %69 = vmatpush1.msra.mxu0 0.0
    %70 = vmatprep.subr.mxu0 0.0
    %71 = vmatpush1.msra.mxu0 0.0
    %72 = vmatprep.subr.mxu0 0.0
    %73 = vmatpush1.msra.mxu0 0.0
    %74 = vmatprep.subr.mxu0 0.0
    %75 = vmatpush1.msra.mxu0 0.0
    %76 = vmatprep.subr.mxu0 0.0
    %77 = vmatpush1.msra.mxu0 0.0
    %78 = vmatprep.subr.mxu0 0.0
    %79 = vmatpush1.msra.mxu0 0.0
    %80 = vmatprep.subr.mxu0 0.0
    %81 = vmatpush1.msra.mxu0 0.0
    %82 = vmatprep.subr.mxu0 0.0
    %83 = vmatpush1.msra.mxu0 0.0
    %84 = vmatprep.subr.mxu0 0.0
    %85 = vmatpush1.msra.mxu0 0.0
    %86 = vmatprep.subr.mxu0 0.0
    %87 = vmatpush1.msra.mxu0 0.0
    %88 = vmatprep.subr.mxu0 0.0
    %89 = vmatpush1.msra.mxu0 0.0
    %90 = vmatprep.subr.mxu0 0.0
    %91 = vmatpush1.msra.mxu0 0.0
    %92 = vmatprep.subr.mxu0 0.0
    %93 = vmatpush1.msra.mxu0 0.0
    %94 = vmatprep.subr.mxu0 0.0
    %95 = vmatpush1.msra.mxu0 0.0
    %96 = vmatprep.mubr.f32.mxu0 0.0
    %97 = vmatmul.mubr.f32.gmra.mrb[0].mxu0 %v26
    %v98 = vpop.f32.mrb[0].mxu0
    %v99 = vadd.f32 %v22, %v98
    %v100 = vpop.f32.mrb[0].mxu0
    %101 = vdwg.mxu0
    %v102 = vand.u32 2147483647, %v99
    %vm103 = vcmp.le.f32.partialorder %v102, 0.7853982
    %vm104 = vcmp.lt.s32.totalorder %v99, 0
    %v105 = vand.u32 %v99, 2139095040
    %v106 = vshrl.u32 %v105, 23
    %v107 = vsub.s32 %v106, 127
    %v108 = vand.u32 2147483647, %v99
    %v109 = vand.u32 %v108, 8388607
    %v110 = vor.u32 %v109, 8388608
    %v111 = vsub.s32 0, %v110
    %v112 = vadd.s32 %v107, 1
    %vm113 = vcmp.gt.s32.totalorder %v112, 0
    %v114 = vsel %vm113, %v112, 0
    %v115 = vshrl.u32 %v114, 5
    %v116 = vand.u32 %v114, 31
    %v117 = vsub.s32 32, %v116
    %v118 = vshrl.u32 683565275, %v117
    %v119 = vshll.u32 683565275, %v116
    %v120 = vshrl.u32 2475754826, %v117
    %v121 = vor.u32 %v119, %v120
    %v122 = vshll.u32 2475754826, %v116
    %v123 = vshrl.u32 2131351028, %v117
    %v124 = vor.u32 %v122, %v123
    %v125 = vshll.u32 2131351028, %v116
    %v126 = vshrl.u32 2102212464, %v117
    %v127 = vor.u32 %v125, %v126
    %v128 = vshll.u32 2102212464, %v116
    %v129 = vshrl.u32 920167782, %v117
    %v130 = vor.u32 %v128, %v129
    %v131 = vshll.u32 920167782, %v116
    %v132 = vshrl.u32 1326507024, %v117
    %v133 = vor.u32 %v131, %v132
    %vm134 = vcmp.lt.s32.totalorder %v115, 1
    %vm135 = vcmp.lt.s32.totalorder %v115, 2
    %vm136 = vcmp.lt.s32.totalorder %v115, 3
    %vm137 = vcmp.lt.s32.totalorder %v115, 4
    %v138 = vsel %vm134, %v118, %v121
    %v139 = vsel %vm137, %v127, 2102212464
    %v140 = vsel %vm136, %v124, %v139
    %v141 = vsel %vm135, %v138, %v140
    %v142 = vsel %vm134, %v121, %v124
    %v143 = vsel %vm137, %v130, 920167782
    %v144 = vsel %vm136, %v127, %v143
    %v145 = vsel %vm135, %v142, %v144
    %v146 = vsel %vm134, %v124, %v127
    %v147 = vsel %vm137, %v133, 1326507024
    %v148 = vsel %vm136, %v130, %v147
    %v149 = vsel %vm135, %v146, %v148
    %v150 = vshll.u32 %v110, 8
    %v151 = vmul.u32.u64.compose %v150, %v149
    %v152 = vextract.low.u32 %v151
    %v153 = vextract.high.u32 %v151
    %v154 = vmul.u32.u64.compose %v150, %v145
    %v155 = vextract.low.u32 %v154
    %v156 = vextract.high.u32 %v154
    %v157 = vmul.u32 %v150, %v141
    %v158 = vadd.s32 %v153, %v155
    %vm159 = vc.u32 %v153, %v155
    %v160 = vadd.s32 %v156, 1
    %v161 = vsel %vm159, %v160, %v156
    %v162 = vadd.s32 %v157, %v161
    %v163 = vadd.s32 %v162, 536870912
    %v164 = vshrl.u32 %v163, 30
    %v165 = vshll.u32 %v164, 30
    %v166 = vsub.s32 %v162, %v165
    %vm167 = vcmp.lt.s32.totalorder %v166, 0
    %v168 = vsub.s32 0, %v166
    %v169 = vsel %vm167, %v168, %v166
    %v170 = vclz %v169
    %v171 = vsub.s32 %v170, 2
    %vm172 = vcmp.gt.s32.totalorder 0, %v171
    %v173 = vsel %vm172, 0, %v171
    %v174 = vsub.s32 32, %v173
    %v175 = vshll.u32 %v166, %v173
    %v176 = vshrl.u32 %v158, %v174
    %v177 = vor.u32 %v175, %v176
    %v178 = vsub.s32 4294967266, %v173
    %v179 = vadd.s32 %v178, 127
    %v180 = vshll.u32 %v179, 23
    %v181 = vor.u32 4788187, %v180
    %v182 = vand.u32 2147483647, %v181
    %v184 = vcvt.s32.f32 %v177
    %v185 = vmul.f32 %v184, %v182
    %v186 = vxor.u32 %v185, 2147483648
    %v187 = vsel %vm104, %v186, %v185
    %v188 = vsub.s32 4, %v164
    %v189 = vsel %vm104, %v188, %v164
    %v190 = vsel %vm103, %v99, %v187
    %v191 = vsel %vm103, 0, %v189
    %v192 = vcosq.f32.pop %v190
    %v193 = vsinq.f32.pop %v190
    %vm194 = vweird.f32 %v99
    %v195 = vadd.s32 %v191, 3
    %v196 = vand.u32 %v195, 3
    %vm197 = vcmp.lt.s32.totalorder %v196, 2
    %vm198 = vcmp.eq.s32.totalorder %v196, 0
    %v199 = vxor.u32 %v193, 2147483648
    %v200 = vsel %vm198, %v192, %v199
    %vm201 = vcmp.eq.s32.totalorder %v196, 2
    %v202 = vxor.u32 %v192, 2147483648
    %v203 = vsel %vm201, %v202, %v193
    %v204 = vsel %vm197, %v200, %v203
    %v205 = vsel %vm194, nan, %v204
    %206 = vst [vmem:[#allocation2] sm:$0xff] %v205
    // Predicated region
    $region14: #{tpu_custom_call.1} parent=1 // pred_check
      _
    $region15: #{tpu_custom_call.1} parent=1 // pred_check_branch
      %208 = sbr.rel (0) target = $region17
    $region16: #{tpu_custom_call.1} parent=1 // pred_region
      %s210 = ssub.s32 128, 128
      %211 = vsyncadd [#allocation3], %s210
      %s213 = sshll.u32 [#allocation2], 4
      %s214 = int_to_ptr.vmem [resolvable:$true] %s213
      %216 = dma.vmem_to_hbm [thread:$0]  %s214, 128, %s3, [#allocation3]
    $region17: #{tpu_custom_call.1} parent=1 // pred_fallthru
      _
    // Predicated region
    $region18: #{tpu_custom_call.1} parent=1 // pred_check
      _
    $region19: #{tpu_custom_call.1} parent=1 // pred_check_branch
      %218 = sbr.rel (0) target = $region21
    $region20: #{tpu_custom_call.1} parent=1 // pred_region
      %219 = dma.done [#allocation3], 128
    $region21: #{tpu_custom_call.1} parent=1 // pred_fallthru
      _
    %220 = vsyncpa [#allocation3], 1

</llo_original>
